<compile_context>
chip_gen: v7x
topology: tpu7x:2x2x1
jax: 0.10.0
libtpu: 0.0.40
codegen_flags: <defaults>
</compile_context>

<pallas_src>
import jax
import jax.numpy as jnp
from jax.experimental import pallas as pl
from jax.experimental.pallas import tpu as pltpu


INPUT_DIM = 3
HIDDEN_DIM = 64
OUTPUT_DIM = 11
NUM_HIDDEN_LAYERS = 2  # -> 3 Linear layers total (in->h, h->h, h->out)

# Per-column VMEM cost ~0.5 KiB (double-buffered x/out blocks + f32 hidden scratch),
# so 16K columns stays ~10-15 MiB: safe even on v7x (64 MiB physical VMEM).
_MAX_TILE_COLS = 16384


def _mlp_kernel(x_ref, w1_ref, b1_ref, w2_ref, b2_ref, w3_ref, b3_ref, o_ref):
    # Whole hot path (3 matmuls + bias adds + ReLUs) fused; batch is on the lane axis.
    x = x_ref[...]                                                       # (3, T) bf16

    h = jnp.dot(w1_ref[...], x, preferred_element_type=jnp.float32) + b1_ref[...]
    h = jnp.maximum(h, 0.0).astype(jnp.bfloat16)                         # (64, T)

    h = jnp.dot(w2_ref[...], h, preferred_element_type=jnp.float32) + b2_ref[...]
    h = jnp.maximum(h, 0.0).astype(jnp.bfloat16)                         # (64, T)

    out = jnp.dot(w3_ref[...], h, preferred_element_type=jnp.float32) + b3_ref[...]
    o_ref[...] = out.astype(o_ref.dtype)                                 # (11, T)


def _round_up(n, m):
    return ((n + m - 1) // m) * m


def _pick_tile(b128, cap_cols):
    """Pick a batch-tile (multiple of 128) for a batch padded to b128 columns.

    Prefers a tile that divides b128 exactly (no extra padding) and keeps the grid
    at >= 2 steps when the batch is big enough (feeds both v7x TensorCores)."""
    n = b128 // 128
    cap_blocks = max(1, min(cap_cols, b128) // 128)
    if n >= 2:
        cap_blocks = min(cap_blocks, max(1, n // 2))     # keep >= 2 grid steps
    div = max(d for d in range(1, cap_blocks + 1) if n % d == 0)
    if div * 4 >= cap_blocks:
        return div * 128                                  # exact divisor, no padding
    # Divisor is tiny (e.g. prime block count): accept a little tile padding rather
    # than paying per-step overhead on many 128-column steps.
    return cap_blocks * 128


def direction_classifier_forward(x, params, *, batch_tile=8192,
                                 out_dtype=jnp.bfloat16, feature_major_out=False):
    """x: (B, INPUT_DIM) float32. params: PyTorch-layout weights.

    Returns logits as (B, OUTPUT_DIM) in `out_dtype` (default bf16), or (OUTPUT_DIM, B)
    feature-major (no extra transpose HBM pass) when feature_major_out=True.
    Note: bf16 matmul operands / bf16 logits are an intentional precision relaxation
    (~1e-2 relative) vs the f32 PyTorch module; accumulation is f32 throughout."""
    B, D = x.shape
    assert D == INPUT_DIM

    # Feature-major + bf16 at the boundary: batch becomes the lane-dense last axis.
    x_fm = x.T.astype(jnp.bfloat16)                                      # (3, B)

    b128 = _round_up(B, 128)
    tile = _pick_tile(b128, max(128, min(int(batch_tile), _MAX_TILE_COLS)))
    Bp = _round_up(b128, tile)
    if Bp != B:
        # Usually only pads up to the next 128 multiple (tile divides b128).
        x_fm = jnp.pad(x_fm, ((0, 0), (0, Bp - B)))

    w1 = params["w1"].astype(jnp.bfloat16)   # (64, 3)
    w2 = params["w2"].astype(jnp.bfloat16)   # (64, 64)
    w3 = params["w3"].astype(jnp.bfloat16)   # (11, 64)
    b1 = params["b1"].astype(jnp.float32)    # (64, 1)  -> broadcast over lanes (batch)
    b2 = params["b2"].astype(jnp.float32)    # (64, 1)
    b3 = params["b3"].astype(jnp.float32)    # (11, 1)

    grid = (Bp // tile,)

    def full(arr):
        # Constant block index -> weights/biases stay VMEM-resident across grid steps.
        return pl.BlockSpec(arr.shape, lambda i: (0,) * arr.ndim)

    out_itemsize = jnp.dtype(out_dtype).itemsize
    flops = 2 * Bp * (INPUT_DIM * HIDDEN_DIM
                      + HIDDEN_DIM * HIDDEN_DIM
                      + HIDDEN_DIM * OUTPUT_DIM)
    weight_bytes = sum(int(a.size) * a.dtype.itemsize for a in (w1, w2, w3, b1, b2, b3))
    bytes_accessed = Bp * INPUT_DIM * 2 + Bp * OUTPUT_DIM * out_itemsize + weight_bytes

    out_fm = pl.pallas_call(
        _mlp_kernel,
        out_shape=jax.ShapeDtypeStruct((OUTPUT_DIM, Bp), out_dtype),
        grid_spec=pltpu.PrefetchScalarGridSpec(
            num_scalar_prefetch=0,
            grid=grid,
            in_specs=[
                pl.BlockSpec((INPUT_DIM, tile), lambda i: (0, i)),         # x tile (3, T)
                full(w1), full(b1),
                full(w2), full(b2),
                full(w3), full(b3),
            ],
            out_specs=pl.BlockSpec((OUTPUT_DIM, tile), lambda i: (0, i)),  # (11, T)
        ),
        compiler_params=pltpu.CompilerParams(
            dimension_semantics=("parallel",),
            # Required on v5e (16 MiB default scoped VMEM) for larger tiles;
            # comfortably below v7x's 64 MiB physical VMEM.
            vmem_limit_bytes=32 * 1024 * 1024,
        ),
        cost_estimate=pl.CostEstimate(
            flops=flops, transcendentals=0, bytes_accessed=bytes_accessed),
    )(x_fm, w1, b1, w2, b2, w3, b3)

    out_fm = out_fm[:, :B]                    # trim batch padding
    if feature_major_out:
        return out_fm                         # (OUTPUT_DIM, B) -- no extra HBM transpose
    return out_fm.T                           # PyTorch layout (B, OUTPUT_DIM), bf16 data


def init_params(key):
    """PyTorch nn.Linear default init (uniform +-1/sqrt(fan_in)).
    Weights stored PyTorch-style as (out_features, in_features); biases as (out_features, 1)."""
    def linear_init(k, fan_in, fan_out):
        kw, kb = jax.random.split(k)
        bound = 1.0 / jnp.sqrt(jnp.float32(fan_in))
        w = jax.random.uniform(kw, (fan_out, fan_in), jnp.float32, -bound, bound)
        b = jax.random.uniform(kb, (fan_out, 1), jnp.float32, -bound, bound)
        return w, b

    k1, k2, k3 = jax.random.split(key, 3)
    w1, b1 = linear_init(k1, INPUT_DIM, HIDDEN_DIM)
    w2, b2 = linear_init(k2, HIDDEN_DIM, HIDDEN_DIM)
    w3, b3 = linear_init(k3, HIDDEN_DIM, OUTPUT_DIM)
    return {"w1": w1, "b1": b1, "w2": w2, "b2": b2, "w3": w3, "b3": b3}


def reference_forward(x, params):
    """Pure-JAX reference mirroring the kernel's precision (bf16 matmul inputs, f32 accumulate)."""
    w1 = params["w1"].astype(jnp.bfloat16)
    w2 = params["w2"].astype(jnp.bfloat16)
    w3 = params["w3"].astype(jnp.bfloat16)
    xb = x.astype(jnp.bfloat16)
    h = jnp.dot(xb, w1.T, preferred_element_type=jnp.float32) + params["b1"][:, 0]
    h = jnp.maximum(h, 0.0).astype(jnp.bfloat16)
    h = jnp.dot(h, w2.T, preferred_element_type=jnp.float32) + params["b2"][:, 0]
    h = jnp.maximum(h, 0.0).astype(jnp.bfloat16)
    return jnp.dot(h, w3.T, preferred_element_type=jnp.float32) + params["b3"][:, 0]


def reference_forward_f32(x, params):
    """Full-f32 reference (semantics of the original PyTorch module)."""
    h = jnp.maximum(x @ params["w1"].T + params["b1"][:, 0], 0.0)
    h = jnp.maximum(h @ params["w2"].T + params["b2"][:, 0], 0.0)
    return h @ params["w3"].T + params["b3"][:, 0]


if __name__ == "__main__":
    key = jax.random.PRNGKey(0)
    kx, kp = jax.random.split(key)
    params = init_params(kp)

    # --- Small-shape test (single tile, batch padded to 128) ---
    batch = 8
    x = jax.random.normal(kx, (batch, INPUT_DIM), jnp.float32)
    out = jax.block_until_ready(direction_classifier_forward(x, params))
    assert out.shape == (batch, OUTPUT_DIM)

    out_f32 = out.astype(jnp.float32)
    ref_bf16 = reference_forward(x, params)
    assert jnp.allclose(out_f32, ref_bf16, atol=2e-2, rtol=2e-2), "mismatch vs bf16 reference"
    ref_f32 = reference_forward_f32(x, params)
    assert jnp.allclose(out_f32, ref_f32, atol=5e-2, rtol=5e-2), "mismatch vs f32 reference"

    # --- Multi-tile, non-multiple-of-tile test (exercises padding + grid index maps,
    #     and the feature-major no-transpose output path) ---
    x_big = jax.random.normal(jax.random.PRNGKey(1), (2500, INPUT_DIM), jnp.float32)
    out_big_fm = jax.block_until_ready(
        direction_classifier_forward(x_big, params, batch_tile=1024, feature_major_out=True))
    assert out_big_fm.shape == (OUTPUT_DIM, 2500)
    ref_big = reference_forward(x_big, params)
    assert jnp.allclose(out_big_fm.T.astype(jnp.float32), ref_big, atol=2e-2, rtol=2e-2), \
        "mismatch vs bf16 reference (multi-tile)"

    print("KERNEL_OK")
</pallas_src>

<mosaic_0001>
module attributes {stable_mosaic.version = 11 : i64} {
  func.func @_mlp_kernel(%arg0: i32, %arg1: memref<3x128xbf16, #tpu.memory_space<vmem>>, %arg2: memref<64x3xbf16, #tpu.memory_space<vmem>>, %arg3: memref<64x1xf32, #tpu.memory_space<vmem>>, %arg4: memref<64x64xbf16, #tpu.memory_space<vmem>>, %arg5: memref<64x1xf32, #tpu.memory_space<vmem>>, %arg6: memref<11x64xbf16, #tpu.memory_space<vmem>>, %arg7: memref<11x1xf32, #tpu.memory_space<vmem>>, %arg8: memref<11x128xbf16, #tpu.memory_space<vmem>>) attributes {dimension_semantics = [#tpu.dimension_semantics<parallel>], iteration_bounds = array<i64: 1>, scalar_prefetch = 0 : i64, scratch_operands = 0 : i64, tpu.core_type = #tpu.core_type<tc>, window_params = [{transform_indices = @transform_0, window_bounds = array<i64: 3, 128>}, {pipeline_mode = #tpu.pipeline_mode<synchronous>, transform_indices = @transform_1, window_bounds = array<i64: 64, 3>}, {pipeline_mode = #tpu.pipeline_mode<synchronous>, transform_indices = @transform_2, window_bounds = array<i64: 64, 1>}, {pipeline_mode = #tpu.pipeline_mode<synchronous>, transform_indices = @transform_3, window_bounds = array<i64: 64, 64>}, {pipeline_mode = #tpu.pipeline_mode<synchronous>, transform_indices = @transform_4, window_bounds = array<i64: 64, 1>}, {pipeline_mode = #tpu.pipeline_mode<synchronous>, transform_indices = @transform_5, window_bounds = array<i64: 11, 64>}, {pipeline_mode = #tpu.pipeline_mode<synchronous>, transform_indices = @transform_6, window_bounds = array<i64: 11, 1>}, {transform_indices = @transform_7, window_bounds = array<i64: 11, 128>}]} {
    %c0 = arith.constant 0 : index
    %c0_0 = arith.constant 0 : index
    %0 = vector.load %arg1[%c0, %c0_0] : memref<3x128xbf16, #tpu.memory_space<vmem>>, vector<3x128xbf16>
    %c0_1 = arith.constant 0 : index
    %c0_2 = arith.constant 0 : index
    %1 = vector.load %arg2[%c0_1, %c0_2] : memref<64x3xbf16, #tpu.memory_space<vmem>>, vector<64x3xbf16>
    %cst = arith.constant dense<0.000000e+00> : vector<64x128xf32>
    %2 = tpu.matmul %1, %0, %cst {dimension_numbers = #tpu.dot_dimension_numbers<[1], [0], [0], [1], [0, 0, 1, 1], [], []>} : vector<64x3xbf16>, vector<3x128xbf16>, vector<64x128xf32> -> vector<64x128xf32>
    %c0_3 = arith.constant 0 : index
    %c0_4 = arith.constant 0 : index
    %3 = vector.load %arg3[%c0_3, %c0_4] : memref<64x1xf32, #tpu.memory_space<vmem>>, vector<64x1xf32>
    %4 = vector.broadcast %3 : vector<64x1xf32> to vector<64x128xf32>
    %5 = arith.addf %2, %4 : vector<64x128xf32>
    %cst_5 = arith.constant 0.000000e+00 : f32
    %6 = vector.broadcast %cst_5 : f32 to vector<64x128xf32>
    %7 = arith.maximumf %5, %6 : vector<64x128xf32>
    %8 = arith.truncf %7 : vector<64x128xf32> to vector<64x128xbf16>
    %c0_6 = arith.constant 0 : index
    %c0_7 = arith.constant 0 : index
    %9 = vector.load %arg4[%c0_6, %c0_7] : memref<64x64xbf16, #tpu.memory_space<vmem>>, vector<64x64xbf16>
    %cst_8 = arith.constant dense<0.000000e+00> : vector<64x128xf32>
    %10 = tpu.matmul %9, %8, %cst_8 {dimension_numbers = #tpu.dot_dimension_numbers<[1], [0], [0], [1], [0, 0, 1, 1], [], []>} : vector<64x64xbf16>, vector<64x128xbf16>, vector<64x128xf32> -> vector<64x128xf32>
    %c0_9 = arith.constant 0 : index
    %c0_10 = arith.constant 0 : index
    %11 = vector.load %arg5[%c0_9, %c0_10] : memref<64x1xf32, #tpu.memory_space<vmem>>, vector<64x1xf32>
    %12 = vector.broadcast %11 : vector<64x1xf32> to vector<64x128xf32>
    %13 = arith.addf %10, %12 : vector<64x128xf32>
    %cst_11 = arith.constant 0.000000e+00 : f32
    %14 = vector.broadcast %cst_11 : f32 to vector<64x128xf32>
    %15 = arith.maximumf %13, %14 : vector<64x128xf32>
    %16 = arith.truncf %15 : vector<64x128xf32> to vector<64x128xbf16>
    %c0_12 = arith.constant 0 : index
    %c0_13 = arith.constant 0 : index
    %17 = vector.load %arg6[%c0_12, %c0_13] : memref<11x64xbf16, #tpu.memory_space<vmem>>, vector<11x64xbf16>
    %cst_14 = arith.constant dense<0.000000e+00> : vector<11x128xf32>
    %18 = tpu.matmul %17, %16, %cst_14 {dimension_numbers = #tpu.dot_dimension_numbers<[1], [0], [0], [1], [0, 0, 1, 1], [], []>} : vector<11x64xbf16>, vector<64x128xbf16>, vector<11x128xf32> -> vector<11x128xf32>
    %c0_15 = arith.constant 0 : index
    %c0_16 = arith.constant 0 : index
    %19 = vector.load %arg7[%c0_15, %c0_16] : memref<11x1xf32, #tpu.memory_space<vmem>>, vector<11x1xf32>
    %20 = vector.broadcast %19 : vector<11x1xf32> to vector<11x128xf32>
    %21 = arith.addf %18, %20 : vector<11x128xf32>
    %22 = arith.truncf %21 : vector<11x128xf32> to vector<11x128xbf16>
    %c0_17 = arith.constant 0 : index
    %c0_18 = arith.constant 0 : index
    %23 = vector.load %arg8[%c0_17, %c0_18] : memref<11x128xbf16, #tpu.memory_space<vmem>>, vector<11x128xbf16>
    tpu.vector_store %arg8[%c0_17, %c0_18], %22 {strides = array<i32>} : memref<11x128xbf16, #tpu.memory_space<vmem>>, vector<11x128xbf16>,
    return
  }
  func.func @transform_0(%arg0: i32) -> (i32, i32) {
    %c0_i32 = arith.constant 0 : i32
    %c0_i32_0 = arith.constant 0 : i32
    return %c0_i32, %arg0 : i32, i32
  }
  func.func @transform_1(%arg0: i32) -> (i32, i32) {
    %c0_i32 = arith.constant 0 : i32
    %c0_i32_0 = arith.constant 0 : i32
    %c0_i32_1 = arith.constant 0 : i32
    return %c0_i32, %c0_i32_0 : i32, i32
  }
  func.func @transform_2(%arg0: i32) -> (i32, i32) {
    %c0_i32 = arith.constant 0 : i32
    %c0_i32_0 = arith.constant 0 : i32
    %c0_i32_1 = arith.constant 0 : i32
    return %c0_i32, %c0_i32_0 : i32, i32
  }
  func.func @transform_3(%arg0: i32) -> (i32, i32) {
    %c0_i32 = arith.constant 0 : i32
    %c0_i32_0 = arith.constant 0 : i32
    %c0_i32_1 = arith.constant 0 : i32
    return %c0_i32, %c0_i32_0 : i32, i32
  }
  func.func @transform_4(%arg0: i32) -> (i32, i32) {
    %c0_i32 = arith.constant 0 : i32
    %c0_i32_0 = arith.constant 0 : i32
    %c0_i32_1 = arith.constant 0 : i32
    return %c0_i32, %c0_i32_0 : i32, i32
  }
  func.func @transform_5(%arg0: i32) -> (i32, i32) {
    %c0_i32 = arith.constant 0 : i32
    %c0_i32_0 = arith.constant 0 : i32
    %c0_i32_1 = arith.constant 0 : i32
    return %c0_i32, %c0_i32_0 : i32, i32
  }
  func.func @transform_6(%arg0: i32) -> (i32, i32) {
    %c0_i32 = arith.constant 0 : i32
    %c0_i32_0 = arith.constant 0 : i32
    %c0_i32_1 = arith.constant 0 : i32
    return %c0_i32, %c0_i32_0 : i32, i32
  }
  func.func @transform_7(%arg0: i32) -> (i32, i32) {
    %c0_i32 = arith.constant 0 : i32
    %c0_i32_0 = arith.constant 0 : i32
    return %c0_i32, %arg0 : i32, i32
  }
}

</mosaic_0001>

<llo_original>
// kernel: tpu_custom_call.1
$region0: #{tpu_custom_call.1}
  #allocation0 [shape = 'u32[]', space=smem, size = 0x4, offset = 0x4, fixed_abs, tag = 'smem constant byte address 0x4 - core index']
  #allocation1 [shape = 'u32[144,128]{1,0:T(1,128)}', space=vmem, size = 0x12000, scoped, tag = 'internal scratch']
  %s0 = inlined_call_operand.vmem [shape: bf16[3,128], index: 0, kind: input, shape index: {}]
  %s1 = inlined_call_operand.vmem [shape: bf16[64,3], index: 1, kind: input, shape index: {}]
  %s2 = inlined_call_operand.vmem [shape: f32[64,1], index: 2, kind: input, shape index: {}]
  %s3 = inlined_call_operand.vmem [shape: bf16[64,64], index: 3, kind: input, shape index: {}]
  %s4 = inlined_call_operand.vmem [shape: f32[64,1], index: 4, kind: input, shape index: {}]
  %s5 = inlined_call_operand.vmem [shape: bf16[11,64], index: 5, kind: input, shape index: {}]
  %s6 = inlined_call_operand.vmem [shape: f32[11,1], index: 6, kind: input, shape index: {}]
  %s7 = inlined_call_operand.hbm [shape: bf16[11,128], index: 7, kind: output, shape index: {}]
  %s8 = sld [smem:[#allocation0]]
  $region38: #{tpu_custom_call.1} parent=0
    _
  %s10 = ssub.s32 1, %s8
  %s11 = scalar_select 0, %s10, %s8
  $region1: #{tpu_custom_call.1} parent=0
    #allocation2 [shape = 'u8[4096]{0}', space=vmem, size = 0x1000, scoped, tag = 'output window, operand 0, single buffered']
    #allocation3 [shape = 's32[1]{0}', space=sflag, size = 0x4, scoped, tag = 'scoped memory for tpu_custom_call.1']
    %12 = vsyncpa [#allocation3], 0
    // Predicated region
    $region2: #{tpu_custom_call.1} parent=1 // pred_check
      _
    $region3: #{tpu_custom_call.1} parent=1 // pred_check_branch
      %14 = sbr.rel (0) target = $region5
    $region4: #{tpu_custom_call.1} parent=1 // pred_region
      _
    $region5: #{tpu_custom_call.1} parent=1 // pred_fallthru
      _
    // Predicated region
    $region6: #{tpu_custom_call.1} parent=1 // pred_check
      _
    $region7: #{tpu_custom_call.1} parent=1 // pred_check_branch
      %16 = sbr.rel (0) target = $region9
    $region8: #{tpu_custom_call.1} parent=1 // pred_region
      _
    $region9: #{tpu_custom_call.1} parent=1 // pred_fallthru
      _
    // Predicated region
    $region10: #{tpu_custom_call.1} parent=1 // pred_check
      _
    $region11: #{tpu_custom_call.1} parent=1 // pred_check_branch
      %18 = sbr.rel (0) target = $region13
    $region12: #{tpu_custom_call.1} parent=1 // pred_region
      _
    $region13: #{tpu_custom_call.1} parent=1 // pred_fallthru
      _
    // Predicated region
    $region14: #{tpu_custom_call.1} parent=1 // pred_check
      _
    $region15: #{tpu_custom_call.1} parent=1 // pred_check_branch
      %20 = sbr.rel (0) target = $region17
    $region16: #{tpu_custom_call.1} parent=1 // pred_region
      _
    $region17: #{tpu_custom_call.1} parent=1 // pred_fallthru
      _
    // Predicated region
    $region18: #{tpu_custom_call.1} parent=1 // pred_check
      _
    $region19: #{tpu_custom_call.1} parent=1 // pred_check_branch
      %22 = sbr.rel (0) target = $region21
    $region20: #{tpu_custom_call.1} parent=1 // pred_region
      _
    $region21: #{tpu_custom_call.1} parent=1 // pred_fallthru
      _
    // Predicated region
    $region22: #{tpu_custom_call.1} parent=1 // pred_check
      _
    $region23: #{tpu_custom_call.1} parent=1 // pred_check_branch
      %24 = sbr.rel (0) target = $region25
    $region24: #{tpu_custom_call.1} parent=1 // pred_region
      _
    $region25: #{tpu_custom_call.1} parent=1 // pred_fallthru
      _
    // Predicated region
    $region26: #{tpu_custom_call.1} parent=1 // pred_check
      _
    $region27: #{tpu_custom_call.1} parent=1 // pred_check_branch
      %26 = sbr.rel (0) target = $region29
    $region28: #{tpu_custom_call.1} parent=1 // pred_region
      _
    $region29: #{tpu_custom_call.1} parent=1 // pred_fallthru
      _
    %v28 = vld [vmem:[%s0] sm:$0x3]
    %v29 = vld [vmem:[%s1] sm:$0xf]
    %v30 = vld [vmem:[%s1 + $0x4] sm:$0xf]
    %v31 = vld [vmem:[%s1 + $0x8] sm:$0xf]
    %v32 = vld [vmem:[%s1 + $0xc] sm:$0xf]
    %v33 = vld [vmem:[%s1 + $0x10] sm:$0xf]
    %v34 = vld [vmem:[%s1 + $0x14] sm:$0xf]
    %v35 = vld [vmem:[%s1 + $0x18] sm:$0xf]
    %v36 = vld [vmem:[%s1 + $0x1c] sm:$0xf]
    %v37 = vld [vmem:[%s2] sm:$0xff]
    %v38 = vld [vmem:[%s2 + $0x8] sm:$0xff]
    %v39 = vld [vmem:[%s2 + $0x10] sm:$0xff]
    %v40 = vld [vmem:[%s2 + $0x18] sm:$0xff]
    %v41 = vld [vmem:[%s2 + $0x20] sm:$0xff]
    %v42 = vld [vmem:[%s2 + $0x28] sm:$0xff]
    %v43 = vld [vmem:[%s2 + $0x30] sm:$0xff]
    %v44 = vld [vmem:[%s2 + $0x38] sm:$0xff]
    %46 = vset.pattern.permute.xlu0 0
    %47 = vperm.xlu0 %46, %v37
    %v48 = vpop.permute.xlu0 %47
    %51 = vset.pattern.permute.xlu0 0
    %52 = vperm.xlu0 %51, %v38
    %v53 = vpop.permute.xlu0 %52
    %56 = vset.pattern.permute.xlu0 0
    %57 = vperm.xlu0 %56, %v39
    %v58 = vpop.permute.xlu0 %57
    %61 = vset.pattern.permute.xlu0 0
    %62 = vperm.xlu0 %61, %v40
    %v63 = vpop.permute.xlu0 %62
    %66 = vset.pattern.permute.xlu0 0
    %67 = vperm.xlu0 %66, %v41
    %v68 = vpop.permute.xlu0 %67
    %71 = vset.pattern.permute.xlu0 0
    %72 = vperm.xlu0 %71, %v42
    %v73 = vpop.permute.xlu0 %72
    %76 = vset.pattern.permute.xlu0 0
    %77 = vperm.xlu0 %76, %v43
    %v78 = vpop.permute.xlu0 %77
    %81 = vset.pattern.permute.xlu0 0
    %82 = vperm.xlu0 %81, %v44
    %v83 = vpop.permute.xlu0 %82
    %v93 = vunpack.c.l.b16 %v29
    %v94 = vunpack.c.l.b16 %v30
    %v95 = vunpack.c.l.b16 %v31
    %v96 = vunpack.c.l.b16 %v32
    %v97 = vunpack.c.l.b16 %v33
    %v98 = vunpack.c.l.b16 %v34
    %v99 = vunpack.c.l.b16 %v35
    %v100 = vunpack.c.l.b16 %v36
    %v101 = vpack.c.b16 %v94, %v93
    %v102 = vpack.c.b16 %v96, %v95
    %v103 = vpack.c.b16 %v98, %v97
    %v104 = vpack.c.b16 %v100, %v99
    %vm105 = vcmask 23552
    %v107 = vsel %vm105, %v101, 0
    %v110 = vsel %vm105, %v102, 0
    %v113 = vsel %vm105, %v103, 0
    %v116 = vsel %vm105, %v104, 0
    %vm118 = vcmask 1040384
    %vm119 = vcmask 1041408
    %v120 = vsel %vm118, 4294967295, 65535
    %v121 = vsel %vm119, %v120, 0
    %v123 = vand.u32 %v28, %v121
    %125 = vmatprep.subr.bf16.mxu0 0
    %126 = vmatpush1.bf16.msra.mxu0 %v123
    %127 = vmatprep.subr.bf16.mxu0 0
    %128 = vmatpush1.bf16.msra.mxu0 0
    %129 = vmatprep.subr.bf16.mxu0 0
    %130 = vmatpush1.bf16.msra.mxu0 0
    %131 = vmatprep.subr.bf16.mxu0 0
    %132 = vmatpush1.bf16.msra.mxu0 0
    %133 = vmatprep.subr.bf16.mxu0 0
    %134 = vmatpush1.bf16.msra.mxu0 0
    %135 = vmatprep.subr.bf16.mxu0 0
    %136 = vmatpush1.bf16.msra.mxu0 0
    %137 = vmatprep.subr.bf16.mxu0 0
    %138 = vmatpush1.bf16.msra.mxu0 0
    %139 = vmatprep.subr.bf16.mxu0 0
    %140 = vmatpush1.bf16.msra.mxu0 0
    %141 = vmatprep.subr.bf16.mxu0 0
    %142 = vmatpush1.bf16.msra.mxu0 0
    %143 = vmatprep.subr.bf16.mxu0 0
    %144 = vmatpush1.bf16.msra.mxu0 0
    %145 = vmatprep.subr.bf16.mxu0 0
    %146 = vmatpush1.bf16.msra.mxu0 0
    %147 = vmatprep.subr.bf16.mxu0 0
    %148 = vmatpush1.bf16.msra.mxu0 0
    %149 = vmatprep.subr.bf16.mxu0 0
    %150 = vmatpush1.bf16.msra.mxu0 0
    %151 = vmatprep.subr.bf16.mxu0 0
    %152 = vmatpush1.bf16.msra.mxu0 0
    %153 = vmatprep.subr.bf16.mxu0 0
    %154 = vmatpush1.bf16.msra.mxu0 0
    %155 = vmatprep.subr.bf16.mxu0 0
    %156 = vmatpush1.bf16.msra.mxu0 0
    %157 = vmatprep.mubr.bf16.mxu0 0
    %158 = vmatmul.mubr.bf16.gmra.mrb[0].mxu0 %v107
    %v159 = vpop.f32.mrb[0].mxu0
    %v160 = vadd.f32 %v48, %v159
    %v161 = vpop.f32.mrb[0].mxu0
    %v162 = vpop.f32.mrb[0].mxu0
    %v163 = vadd.f32 %v53, %v162
    %v164 = vpop.f32.mrb[0].mxu0
    %165 = vmatprep.mubr.bf16.mxu0 0
    %166 = vmatmul.mubr.bf16.gmra.mrb[0].mxu0 %v110
    %v167 = vpop.f32.mrb[0].mxu0
    %v168 = vadd.f32 %v58, %v167
    %v169 = vpop.f32.mrb[0].mxu0
    %v170 = vpop.f32.mrb[0].mxu0
    %v171 = vadd.f32 %v63, %v170
    %v172 = vpop.f32.mrb[0].mxu0
    %173 = vmatprep.mubr.bf16.mxu0 0
    %174 = vmatmul.mubr.bf16.gmra.mrb[0].mxu0 %v113
    %v175 = vpop.f32.mrb[0].mxu0
    %v176 = vadd.f32 %v68, %v175
    %v177 = vpop.f32.mrb[0].mxu0
    %v178 = vpop.f32.mrb[0].mxu0
    %v179 = vadd.f32 %v73, %v178
    %v180 = vpop.f32.mrb[0].mxu0
    %181 = vmatprep.mubr.bf16.mxu0 0
    %182 = vmatmul.mubr.bf16.gmra.mrb[0].mxu0 %v116
    %v183 = vpop.f32.mrb[0].mxu0
    %v184 = vadd.f32 %v78, %v183
    %v185 = vpop.f32.mrb[0].mxu0
    %v186 = vpop.f32.mrb[0].mxu0
    %v187 = vadd.f32 %v83, %v186
    %v188 = vpop.f32.mrb[0].mxu0
    %189 = vdwg.mxu0
    %v190 = vmax.f32 %v160, 0.0
    %v191 = vmax.f32 %v163, 0.0
    %v192 = vmax.f32 %v168, 0.0
    %v193 = vmax.f32 %v171, 0.0
    %v194 = vmax.f32 %v176, 0.0
    %v195 = vmax.f32 %v179, 0.0
    %v196 = vmax.f32 %v184, 0.0
    %v197 = vmax.f32 %v187, 0.0
    %v198 = vpack.c.bf16 %v191, %v190
    %v199 = vpack.c.bf16 %v193, %v192
    %v200 = vpack.c.bf16 %v195, %v194
    %v201 = vpack.c.bf16 %v197, %v196
    %v202 = vld [vmem:[%s3] sm:$0xf]
    %v203 = vld [vmem:[%s3 + $0x4] sm:$0xf]
    %v204 = vld [vmem:[%s3 + $0x8] sm:$0xf]
    %v205 = vld [vmem:[%s3 + $0xc] sm:$0xf]
    %v206 = vld [vmem:[%s3 + $0x10] sm:$0xf]
    %v207 = vld [vmem:[%s3 + $0x14] sm:$0xf]
    %v208 = vld [vmem:[%s3 + $0x18] sm:$0xf]
    %v209 = vld [vmem:[%s3 + $0x1c] sm:$0xf]
    %v210 = vld [vmem:[%s4] sm:$0xff]
    %v211 = vld [vmem:[%s4 + $0x8] sm:$0xff]
    %v212 = vld [vmem:[%s4 + $0x10] sm:$0xff]
    %v213 = vld [vmem:[%s4 + $0x18] sm:$0xff]
    %v214 = vld [vmem:[%s4 + $0x20] sm:$0xff]
    %v215 = vld [vmem:[%s4 + $0x28] sm:$0xff]
    %v216 = vld [vmem:[%s4 + $0x30] sm:$0xff]
    %v217 = vld [vmem:[%s4 + $0x38] sm:$0xff]
    %219 = vset.pattern.permute.xlu0 0
    %220 = vperm.xlu0 %219, %v210
    %v221 = vpop.permute.xlu0 %220
    %224 = vset.pattern.permute.xlu0 0
    %225 = vperm.xlu0 %224, %v211
    %v226 = vpop.permute.xlu0 %225
    %229 = vset.pattern.permute.xlu0 0
    %230 = vperm.xlu0 %229, %v212
    %v231 = vpop.permute.xlu0 %230
    %234 = vset.pattern.permute.xlu0 0
    %235 = vperm.xlu0 %234, %v213
    %v236 = vpop.permute.xlu0 %235
    %239 = vset.pattern.permute.xlu0 0
    %240 = vperm.xlu0 %239, %v214
    %v241 = vpop.permute.xlu0 %240
    %244 = vset.pattern.permute.xlu0 0
    %245 = vperm.xlu0 %244, %v215
    %v246 = vpop.permute.xlu0 %245
    %249 = vset.pattern.permute.xlu0 0
    %250 = vperm.xlu0 %249, %v216
    %v251 = vpop.permute.xlu0 %250
    %254 = vset.pattern.permute.xlu0 0
    %255 = vperm.xlu0 %254, %v217
    %v256 = vpop.permute.xlu0 %255
    %v266 = vunpack.c.l.b16 %v202
    %v267 = vunpack.c.l.b16 %v203
    %v268 = vunpack.c.l.b16 %v204
    %v269 = vunpack.c.l.b16 %v205
    %v270 = vunpack.c.l.b16 %v206
    %v271 = vunpack.c.l.b16 %v207
    %v272 = vunpack.c.l.b16 %v208
    %v273 = vunpack.c.l.b16 %v209
    %v274 = vpack.c.b16 %v267, %v266
    %v275 = vpack.c.b16 %v269, %v268
    %v276 = vpack.c.b16 %v271, %v270
    %v277 = vpack.c.b16 %v273, %v272
    %vm278 = vcmask 523264
    %v280 = vsel %vm278, %v274, 0
    %v283 = vsel %vm278, %v275, 0
    %v286 = vsel %vm278, %v276, 0
    %v289 = vsel %vm278, %v277, 0
    %291 = vmatprep.subr.bf16.mxu0 0
    %292 = vmatpush1.bf16.msra.mxu0 %v198
    %293 = vmatprep.subr.bf16.mxu0 0
    %294 = vmatpush1.bf16.msra.mxu0 %v199
    %295 = vmatprep.subr.bf16.mxu0 0
    %296 = vmatpush1.bf16.msra.mxu0 %v200
    %297 = vmatprep.subr.bf16.mxu0 0
    %298 = vmatpush1.bf16.msra.mxu0 %v201
    %299 = vmatprep.subr.bf16.mxu0 0
    %300 = vmatpush1.bf16.msra.mxu0 0
    %301 = vmatprep.subr.bf16.mxu0 0
    %302 = vmatpush1.bf16.msra.mxu0 0
    %303 = vmatprep.subr.bf16.mxu0 0
    %304 = vmatpush1.bf16.msra.mxu0 0
    %305 = vmatprep.subr.bf16.mxu0 0
    %306 = vmatpush1.bf16.msra.mxu0 0
    %307 = vmatprep.subr.bf16.mxu0 0
    %308 = vmatpush1.bf16.msra.mxu0 0
    %309 = vmatprep.subr.bf16.mxu0 0
    %310 = vmatpush1.bf16.msra.mxu0 0
    %311 = vmatprep.subr.bf16.mxu0 0
    %312 = vmatpush1.bf16.msra.mxu0 0
    %313 = vmatprep.subr.bf16.mxu0 0
    %314 = vmatpush1.bf16.msra.mxu0 0
    %315 = vmatprep.subr.bf16.mxu0 0
    %316 = vmatpush1.bf16.msra.mxu0 0
    %317 = vmatprep.subr.bf16.mxu0 0
    %318 = vmatpush1.bf16.msra.mxu0 0
    %319 = vmatprep.subr.bf16.mxu0 0
    %320 = vmatpush1.bf16.msra.mxu0 0
    %321 = vmatprep.subr.bf16.mxu0 0
    %322 = vmatpush1.bf16.msra.mxu0 0
    %323 = vmatprep.mubr.bf16.mxu0 0
    %324 = vmatmul.mubr.bf16.gmra.mrb[0].mxu0 %v280
    %v325 = vpop.f32.mrb[0].mxu0
    %v326 = vadd.f32 %v221, %v325
    %v327 = vpop.f32.mrb[0].mxu0
    %v328 = vpop.f32.mrb[0].mxu0
    %v329 = vadd.f32 %v226, %v328
    %v330 = vpop.f32.mrb[0].mxu0
    %331 = vmatprep.mubr.bf16.mxu0 0
    %332 = vmatmul.mubr.bf16.gmra.mrb[0].mxu0 %v283
    %v333 = vpop.f32.mrb[0].mxu0
    %v334 = vadd.f32 %v231, %v333
    %v335 = vpop.f32.mrb[0].mxu0
    %v336 = vpop.f32.mrb[0].mxu0
    %v337 = vadd.f32 %v236, %v336
    %v338 = vpop.f32.mrb[0].mxu0
    %339 = vmatprep.mubr.bf16.mxu0 0
    %340 = vmatmul.mubr.bf16.gmra.mrb[0].mxu0 %v286
    %v341 = vpop.f32.mrb[0].mxu0
    %v342 = vadd.f32 %v241, %v341
    %v343 = vpop.f32.mrb[0].mxu0
    %v344 = vpop.f32.mrb[0].mxu0
    %v345 = vadd.f32 %v246, %v344
    %v346 = vpop.f32.mrb[0].mxu0
    %347 = vmatprep.mubr.bf16.mxu0 0
    %348 = vmatmul.mubr.bf16.gmra.mrb[0].mxu0 %v289
    %v349 = vpop.f32.mrb[0].mxu0
    %v350 = vadd.f32 %v251, %v349
    %v351 = vpop.f32.mrb[0].mxu0
    %v352 = vpop.f32.mrb[0].mxu0
    %v353 = vadd.f32 %v256, %v352
    %v354 = vpop.f32.mrb[0].mxu0
    %355 = vdwg.mxu0
    %v356 = vmax.f32 %v326, 0.0
    %v357 = vmax.f32 %v329, 0.0
    %v358 = vmax.f32 %v334, 0.0
    %v359 = vmax.f32 %v337, 0.0
    %v360 = vmax.f32 %v342, 0.0
    %v361 = vmax.f32 %v345, 0.0
    %v362 = vmax.f32 %v350, 0.0
    %v363 = vmax.f32 %v353, 0.0
    %v364 = vpack.c.bf16 %v357, %v356
    %v365 = vpack.c.bf16 %v359, %v358
    %v366 = vpack.c.bf16 %v361, %v360
    %v367 = vpack.c.bf16 %v363, %v362
    %v368 = vld [vmem:[%s5] sm:$0xf]
    %v369 = vld [vmem:[%s5 + $0x4] sm:$0x3]
    %v370 = vld [vmem:[%s6] sm:$0xff]
    %v371 = vld [vmem:[%s6 + $0x8] sm:$0x7]
    %373 = vset.pattern.permute.xlu0 0
    %374 = vperm.xlu0 %373, %v370
    %v375 = vpop.permute.xlu0 %374
    %378 = vset.pattern.permute.xlu0 0
    %379 = vperm.xlu0 %378, %v371
    %v380 = vpop.permute.xlu0 %379
    %v384 = vunpack.c.l.b16 %v368
    %v385 = vunpack.c.l.b16 %v369
    %v386 = vpack.c.b16 %v385, %v384
    %v388 = vsel %vm278, %v386, 0
    %390 = vmatprep.subr.bf16.mxu0 0
    %391 = vmatpush1.bf16.msra.mxu0 %v364
    %392 = vmatprep.subr.bf16.mxu0 0
    %393 = vmatpush1.bf16.msra.mxu0 %v365
    %394 = vmatprep.subr.bf16.mxu0 0
    %395 = vmatpush1.bf16.msra.mxu0 %v366
    %396 = vmatprep.subr.bf16.mxu0 0
    %397 = vmatpush1.bf16.msra.mxu0 %v367
    %398 = vmatprep.subr.bf16.mxu0 0
    %399 = vmatpush1.bf16.msra.mxu0 0
    %400 = vmatprep.subr.bf16.mxu0 0
    %401 = vmatpush1.bf16.msra.mxu0 0
    %402 = vmatprep.subr.bf16.mxu0 0
    %403 = vmatpush1.bf16.msra.mxu0 0
    %404 = vmatprep.subr.bf16.mxu0 0
    %405 = vmatpush1.bf16.msra.mxu0 0
    %406 = vmatprep.subr.bf16.mxu0 0
    %407 = vmatpush1.bf16.msra.mxu0 0
    %408 = vmatprep.subr.bf16.mxu0 0
    %409 = vmatpush1.bf16.msra.mxu0 0
    %410 = vmatprep.subr.bf16.mxu0 0
    %411 = vmatpush1.bf16.msra.mxu0 0
    %412 = vmatprep.subr.bf16.mxu0 0
    %413 = vmatpush1.bf16.msra.mxu0 0
    %414 = vmatprep.subr.bf16.mxu0 0
    %415 = vmatpush1.bf16.msra.mxu0 0
    %416 = vmatprep.subr.bf16.mxu0 0
    %417 = vmatpush1.bf16.msra.mxu0 0
    %418 = vmatprep.subr.bf16.mxu0 0
    %419 = vmatpush1.bf16.msra.mxu0 0
    %420 = vmatprep.subr.bf16.mxu0 0
    %421 = vmatpush1.bf16.msra.mxu0 0
    %422 = vmatprep.mubr.bf16.mxu0 0
    %423 = vmatmul.mubr.bf16.gmra.mrb[0].mxu0 %v388
    %v424 = vpop.f32.mrb[0].mxu0
    %v425 = vadd.f32 %v375, %v424
    %v426 = vpop.f32.mrb[0].mxu0
    %v427 = vpop.f32.mrb[0].mxu0
    %v428 = vadd.f32 %v380, %v427
    %v429 = vpop.f32.mrb[0].mxu0
    %430 = vdwg.mxu0
    %v431 = vpack.c.bf16 %v428, %v425
    %v433 = vunpack.c.l.b16 %v431
    %v434 = vunpack.c.h.b16 %v431
    %v435 = vpack.c.b16 %v433, %v433
    %v436 = vpack.c.b16 %v434, %v434
    %439 = vst [vmem:[#allocation2] sm:$0xf] %v435
    %vm440 = vcmask 1041408
    %vm441 = vsmask.f32 1280
    %vm442 = vmand %vm440, %vm441
    %v443 = vld [vmem:[#allocation2 + $0x4] sm:$0x3]
    %v444 = vsel %vm442, %v436, %v443
    %445 = vst [vmem:[#allocation2 + $0x4] sm:$0x3] %v444
    // Predicated region
    $region30: #{tpu_custom_call.1} parent=1 // pred_check
      _
    $region31: #{tpu_custom_call.1} parent=1 // pred_check_branch
      %447 = sbr.rel (0) target = $region33
    $region32: #{tpu_custom_call.1} parent=1 // pred_region
      %s449 = ssub.s32 128, 128
      %450 = vsyncadd [#allocation3], %s449
      %s451 = sshll.u32 [#allocation2], 4
      %s452 = int_to_ptr.vmem [resolvable:$true] %s451
      %457 = dma.vmem_to_hbm [thread:$0]  %s452, 128, %s7, [#allocation3], 64, 64, 4
    $region33: #{tpu_custom_call.1} parent=1 // pred_fallthru
      _
    // Predicated region
    $region34: #{tpu_custom_call.1} parent=1 // pred_check
      _
    $region35: #{tpu_custom_call.1} parent=1 // pred_check_branch
      %459 = sbr.rel (0) target = $region37
    $region36: #{tpu_custom_call.1} parent=1 // pred_region
      %460 = dma.done [#allocation3], 128
    $region37: #{tpu_custom_call.1} parent=1 // pred_fallthru
      _
    %461 = vsyncpa [#allocation3], 1

</llo_original>
